<compile_context>
chip_gen: v7x
topology: tpu7x:2x2x1
jax: 0.10.0
libtpu: 0.0.40
codegen_flags: <defaults>
</compile_context>

<pallas_src>
import jax
import jax.numpy as jnp
import numpy as np
from jax import lax
from jax.experimental import pallas as pl
from jax.experimental.pallas import tpu as pltpu

C1_IN, C1_OUT = 3, 16
C2_IN, C2_OUT = 16, 32
C3_IN, C3_OUT = 32, 64
EMB = 64                            # image_embedding_size == semi_memory_size
N_ACTIONS = 7

POOL_CELLS = 9                      # 3x3 pooled map
U_FEATS = POOL_CELLS * 4 * C1_IN    # 108 per-quadrant im2col lanes
U_PAD = 128                         # padded to a full lane tile
X1_WIDTH = 4 * U_PAD                # 512 (4 pool quadrants, u-major)
POOL_WIDTH = POOL_CELLS * C1_OUT    # 144 (pool cell major, channel minor)
H2_WIDTH = 4 * C2_OUT               # 128 (conv2 position major, channel minor)
BATCH_ALIGN = 16                    # sublane granularity (bf16 tile = (16,128))


def acmodel_kernel(x_ref, w1_ref, b1_ref, w2_ref, b2_ref, w3_ref, b3_ref,
                   hw1_ref, hb1_ref, hw2_ref, hb2_ref, out_ref):
    f32, bf16 = jnp.float32, jnp.bfloat16
    x = x_ref[...]                       # (TB, 512) bf16; 4 u-major 128-lane blocks
    w1 = w1_ref[...]                     # (128, 144) bf16 shared block-diag conv1 weight

    # conv1 + maxpool: every conv1 position uses the same (12,16) weight, so each
    # pool-quadrant u is a dense bf16 dot (TB,128)x(128,144) against the SAME
    # block-diagonal weight; maxpool = elementwise max of the 4 results (VPU only).
    # Bias + ReLU commute with the max (same per-lane bias for every quadrant).
    def quadrant(u):
        return jnp.dot(x[:, u * U_PAD:(u + 1) * U_PAD], w1,
                       preferred_element_type=f32)

    h1 = jnp.maximum(jnp.maximum(quadrant(0), quadrant(1)),
                     jnp.maximum(quadrant(2), quadrant(3)))       # (TB,144) f32
    pool = jnp.maximum(h1 + b1_ref[...], 0.0)                     # pooled map, f32

    # conv2 (+ReLU): patch gather folded exactly into the (144,128) effective weight.
    h2 = jnp.dot(pool.astype(bf16), w2_ref[...], preferred_element_type=f32)
    h2 = jnp.maximum(h2 + b2_ref[...], 0.0)                       # (TB,128) f32

    # conv3 (+ReLU): h2 lane order is already the (kh,kw,cin) patch layout.
    emb = jnp.dot(h2.astype(bf16), w3_ref[...], preferred_element_type=f32)
    emb = jnp.maximum(emb + b3_ref[...], 0.0)                     # (TB,64) == flatten

    # fused actor+critic heads (f32: tiny FLOPs, keeps head numerics f32-faithful).
    h = jnp.tanh(jnp.dot(emb, hw1_ref[...], preferred_element_type=f32)
                 + hb1_ref[...])                                  # (TB,128) = [actor|critic]
    o = jnp.dot(h, hw2_ref[...], preferred_element_type=f32) + hb2_ref[...]  # (TB, A+1)

    n_act = o.shape[-1] - 1
    logits = o[:, :n_act]
    value = o[:, n_act:]
    m = jnp.max(logits, axis=-1, keepdims=True)
    e = jnp.exp(logits - m)
    logp = logits - m - jnp.log(jnp.sum(e, axis=-1, keepdims=True))

    # lane-dense packed output: [log_probs | value | zero pad] -> one unmasked store
    pad = jnp.zeros((logp.shape[0], out_ref.shape[-1] - n_act - 1), f32)
    out_ref[...] = jnp.concatenate([logp, value, pad], axis=-1)


def _round_up(x, m):
    return ((x + m - 1) // m) * m


def _cdiv(a, b):
    return -(-a // b)


def _im2col_conv1(image):
    """(N,7,7,3) f32 -> (N, 512) f32, pool-quadrant (u) major.  Per-u block =
    9 pool cells x 12 patch features (kh,kw,cin), zero-padded 108 -> 128 lanes."""
    n = image.shape[0]
    ublocks = []
    for u in range(4):
        a, b = divmod(u, 2)
        cells = []
        for i in range(3):
            for j in range(3):
                h, w = 2 * i + a, 2 * j + b
                cells.append(image[:, h:h + 2, w:w + 2, :].reshape(n, 4 * C1_IN))
        blk = jnp.concatenate(cells, axis=-1)                       # (N,108)
        ublocks.append(jnp.pad(blk, ((0, 0), (0, U_PAD - U_FEATS))))
    return jnp.concatenate(ublocks, axis=-1)                        # (N,512)


def _conv1_blockdiag(w1):
    """(12,16) -> (128,144): 9 copies of w1 on the diagonal (one per pool cell),
    rows zero-padded 108 -> 128.  Exact (kron with identity)."""
    bd = jnp.kron(jnp.eye(POOL_CELLS, dtype=jnp.float32), w1)       # (108,144)
    return jnp.pad(bd, ((0, U_PAD - U_FEATS), (0, 0)))              # (128,144)


def _conv2_effective_weight(w2):
    """Fold conv2's im2col gather into its weight: exact (144,128) matrix mapping
    pooled lanes ((i,j), cin) directly to conv2 output lanes ((h,w), cout)."""
    zeros16 = jnp.zeros((C1_OUT, C2_OUT), jnp.float32)
    cols = []
    for h in range(2):
        for w in range(2):
            rows = [zeros16] * POOL_CELLS
            for dh in range(2):
                for dw in range(2):
                    tap = w2[(dh * 2 + dw) * C1_OUT:(dh * 2 + dw + 1) * C1_OUT, :]
                    rows[(h + dh) * 3 + (w + dw)] = tap
            cols.append(jnp.concatenate(rows, axis=0))              # (144, 32)
    return jnp.concatenate(cols, axis=1)                            # (144, 128)


def prepare_params(params):
    """One-time weight packing (hoisted out of the per-call forward):
    block-diagonal conv1 weight, folded conv2 weight, fused heads, bf16 casts."""
    f32, bf16 = jnp.float32, jnp.bfloat16
    n_actions = params["aw2"].shape[1]

    hw2 = jnp.zeros((2 * 64, n_actions + 1), f32)
    hw2 = hw2.at[:64, :n_actions].set(params["aw2"])   # actor logits from h[:, :64]
    hw2 = hw2.at[64:, n_actions:].set(params["cw2"])   # value from h[:, 64:]

    return {
        "w1": _conv1_blockdiag(params["w1"]).astype(bf16),              # (128,144)
        "b1": jnp.tile(params["b1"], (1, POOL_CELLS)).astype(f32),      # (1,144)
        "w2": _conv2_effective_weight(params["w2"]).astype(bf16),       # (144,128)
        "b2": jnp.tile(params["b2"], (1, 4)).astype(f32),               # (1,128)
        "w3": params["w3"].astype(bf16),                                # (128,64)
        "b3": params["b3"].astype(f32),                                 # (1,64)
        "hw1": jnp.concatenate([params["aw1"], params["cw1"]], axis=1).astype(f32),
        "hb1": jnp.concatenate([params["ab1"], params["cb1"]], axis=1).astype(f32),
        "hw2": hw2,                                                     # (128, A+1)
        "hb2": jnp.concatenate([params["ab2"], params["cb2"]], axis=1).astype(f32),
    }


def ac_model_forward(image, memory, prepared, *, block_batch=1024):
    """Returns (log_probs, value, memory) — log_probs are the Categorical logits
    (log-softmax of the actor head); memory passes through (use_memory=False)."""
    n = image.shape[0]
    n_actions = prepared["hw2"].shape[1] - 1
    out_width = _round_up(n_actions + 1, 128)

    # Batch tiling: 16-row aligned (bf16 tile); big tiles to amortize per-step
    # overhead; >=2 grid steps for medium batches so ("parallel",) can use both
    # TensorCores on v7x; tb chosen to minimize padding waste at large batches.
    n_al = _round_up(max(n, 1), BATCH_ALIGN)
    n_steps = max(1, _cdiv(n_al, block_batch))
    if n_steps == 1 and n_al >= 2 * BATCH_ALIGN:
        n_steps = 2
    tb = _round_up(_cdiv(n_al, n_steps), BATCH_ALIGN)
    n_pad = _round_up(n_al, tb)

    x1 = _im2col_conv1(image.astype(jnp.float32)).astype(jnp.bfloat16)   # (n, 512)
    if n_pad != n:
        x1 = jnp.pad(x1, ((0, n_pad - n), (0, 0)))

    weights = [prepared[k] for k in
               ("w1", "b1", "w2", "b2", "w3", "b3", "hw1", "hb1", "hw2", "hb2")]

    in_specs = [pl.BlockSpec((tb, X1_WIDTH), lambda i: (i, 0))]
    # Resident full-array blocks with constant index_maps (stay in VMEM across steps).
    in_specs += [pl.BlockSpec(w.shape, lambda i: (0, 0)) for w in weights]
    out_spec = pl.BlockSpec((tb, out_width), lambda i: (i, 0))

    param_bytes = sum(int(np.prod(w.shape)) * w.dtype.itemsize for w in weights)
    flops = 2 * n_pad * (4 * U_PAD * POOL_WIDTH          # conv1: 4 x (128x144)
                         + POOL_WIDTH * H2_WIDTH         # conv2: 144x128
                         + H2_WIDTH * EMB                # conv3: 128x64
                         + EMB * 2 * 64                  # fused head-1: 64x128
                         + 2 * 64 * (n_actions + 1))     # fused head-2: 128x(A+1)
    cost = pl.CostEstimate(
        flops=int(flops),
        transcendentals=int(n_pad * (2 * 64 + n_actions + 2)),
        bytes_accessed=int(2 * n_pad * X1_WIDTH + 4 * n_pad * out_width + param_bytes))

    out = pl.pallas_call(
        acmodel_kernel,
        out_shape=jax.ShapeDtypeStruct((n_pad, out_width), jnp.float32),
        grid=(n_pad // tb,),
        in_specs=in_specs,
        out_specs=out_spec,
        compiler_params=pltpu.CompilerParams(dimension_semantics=("parallel",)),
        cost_estimate=cost,
    )(x1, *weights)

    log_probs = out[:n, :n_actions]
    value = out[:n, n_actions]
    return log_probs, value, memory        # use_memory=False -> memory passthrough


def init_params(key, n_actions=N_ACTIONS):
    """Deterministic synthetic init. Linear layers follow initialize_parameters():
    weight ~ N(0,1) row-normalized, bias = 0. Conv layers: scaled normal (synthetic)."""
    ks = jax.random.split(key, 8)

    def conv_w(k, cin, cout):
        fan_in = 4 * cin
        return jax.random.normal(k, (4 * cin, cout), jnp.float32) / np.sqrt(fan_in)

    def linear(k, n_in, n_out):
        w = jax.random.normal(k, (n_out, n_in), jnp.float32)
        w = w / jnp.sqrt(jnp.sum(w * w, axis=1, keepdims=True))
        return w.T, jnp.zeros((1, n_out), jnp.float32)   # stored transposed: y = x @ wT + b

    p = {}
    p["w1"], p["b1"] = conv_w(ks[0], C1_IN, C1_OUT), jnp.zeros((1, C1_OUT), jnp.float32)
    p["w2"], p["b2"] = conv_w(ks[1], C2_IN, C2_OUT), jnp.zeros((1, C2_OUT), jnp.float32)
    p["w3"], p["b3"] = conv_w(ks[2], C3_IN, C3_OUT), jnp.zeros((1, C3_OUT), jnp.float32)
    p["aw1"], p["ab1"] = linear(ks[3], EMB, 64)
    p["aw2"], p["ab2"] = linear(ks[4], 64, n_actions)
    p["cw1"], p["cb1"] = linear(ks[5], EMB, 64)
    p["cw2"], p["cb2"] = linear(ks[6], 64, 1)
    return p


def reference_forward(image, params, *, quantize=False):
    """Pure-JAX reference (lax.conv / reduce_window).  With quantize=True it
    emulates the kernel's numerics exactly: bf16-rounded conv operands (weights and
    layer inputs), f32 accumulation, f32 heads."""
    hp = lax.Precision.HIGHEST
    dn = ("NHWC", "HWIO", "NHWC")
    q = (lambda a: a.astype(jnp.bfloat16).astype(jnp.float32)) if quantize else (lambda a: a)

    def conv(x, wflat, b, cin, cout):
        w = q(wflat).reshape(2, 2, cin, cout)
        y = lax.conv_general_dilated(q(x), w, (1, 1), "VALID",
                                     dimension_numbers=dn, precision=hp)
        return jnp.maximum(y + b.reshape(1, 1, 1, cout), 0.0)

    x = conv(image, params["w1"], params["b1"], C1_IN, C1_OUT)
    x = lax.reduce_window(x, -jnp.inf, lax.max, (1, 2, 2, 1), (1, 2, 2, 1), "VALID")
    x = conv(x, params["w2"], params["b2"], C2_IN, C2_OUT)
    x = conv(x, params["w3"], params["b3"], C3_IN, C3_OUT)
    emb = x.reshape(x.shape[0], -1)

    ha = jnp.tanh(jnp.dot(emb, params["aw1"], precision=hp) + params["ab1"])
    logits = jnp.dot(ha, params["aw2"], precision=hp) + params["ab2"]
    logp = jax.nn.log_softmax(logits, axis=-1)
    hc = jnp.tanh(jnp.dot(emb, params["cw1"], precision=hp) + params["cb1"])
    v = jnp.dot(hc, params["cw2"], precision=hp) + params["cb2"]
    return logp, v[:, 0]


# TODO(synk): LSTM memory path, GRU/conv/bow instruction encoders and the Categorical
# distribution object are not exercised by the default config (use_memory=False,
# use_instr=None); the kernel returns the log-softmax logits and value directly.

if __name__ == "__main__":
    key = jax.random.PRNGKey(0)
    k_img, k_param = jax.random.split(key)

    batch = 2
    # babyai obs.image is (N, 7, 7, 3); cnn1 reduces 7x7 -> 1x1 with 64 channels.
    image = jax.random.uniform(k_img, (batch, 7, 7, 3), jnp.float32, 0.0, 10.0)
    memory = jnp.zeros((batch, 2 * EMB), jnp.float32)   # memory_size = 2 * semi_memory_size
    params = init_params(k_param)

    prepared = prepare_params(params)                    # one-time packing (hoisted)
    fwd = jax.jit(ac_model_forward)
    log_probs, value, memory_out = fwd(image, memory, prepared)
    jax.block_until_ready((log_probs, value, memory_out))

    # Tight check against a reference that emulates the kernel's bf16-operand /
    # f32-accumulate conv numerics (differences: accumulation order only).
    ref_logp_q, ref_value_q = reference_forward(image, params, quantize=True)
    np.testing.assert_allclose(np.asarray(log_probs), np.asarray(ref_logp_q),
                               rtol=5e-3, atol=5e-3)
    np.testing.assert_allclose(np.asarray(value), np.asarray(ref_value_q),
                               rtol=5e-3, atol=5e-3)

    # Loose sanity check against the full-f32 reference (bf16 conv rounding only).
    ref_logp, ref_value = reference_forward(image, params, quantize=False)
    np.testing.assert_allclose(np.asarray(log_probs), np.asarray(ref_logp),
                               rtol=0.05, atol=0.25)
    np.testing.assert_allclose(np.asarray(value), np.asarray(ref_value),
                               rtol=0.05, atol=0.25)

    assert log_probs.shape == (batch, N_ACTIONS)
    assert value.shape == (batch,)
    assert memory_out.shape == (batch, 2 * EMB)

    print("KERNEL_OK")
</pallas_src>

<mosaic_0001>
module attributes {stable_mosaic.version = 11 : i64} {
  func.func @acmodel_kernel(%arg0: i32, %arg1: memref<16x512xbf16, #tpu.memory_space<vmem>>, %arg2: memref<128x144xbf16, #tpu.memory_space<vmem>>, %arg3: memref<1x144xf32, #tpu.memory_space<vmem>>, %arg4: memref<144x128xbf16, #tpu.memory_space<vmem>>, %arg5: memref<1x128xf32, #tpu.memory_space<vmem>>, %arg6: memref<128x64xbf16, #tpu.memory_space<vmem>>, %arg7: memref<1x64xf32, #tpu.memory_space<vmem>>, %arg8: memref<64x128xf32, #tpu.memory_space<vmem>>, %arg9: memref<1x128xf32, #tpu.memory_space<vmem>>, %arg10: memref<128x8xf32, #tpu.memory_space<vmem>>, %arg11: memref<1x8xf32, #tpu.memory_space<vmem>>, %arg12: memref<16x128xf32, #tpu.memory_space<vmem>>) attributes {dimension_semantics = [#tpu.dimension_semantics<parallel>], iteration_bounds = array<i64: 1>, scalar_prefetch = 0 : i64, scratch_operands = 0 : i64, tpu.core_type = #tpu.core_type<tc>, window_params = [{transform_indices = @transform_0, window_bounds = array<i64: 16, 512>}, {pipeline_mode = #tpu.pipeline_mode<synchronous>, transform_indices = @transform_1, window_bounds = array<i64: 128, 144>}, {pipeline_mode = #tpu.pipeline_mode<synchronous>, transform_indices = @transform_2, window_bounds = array<i64: 1, 144>}, {pipeline_mode = #tpu.pipeline_mode<synchronous>, transform_indices = @transform_3, window_bounds = array<i64: 144, 128>}, {pipeline_mode = #tpu.pipeline_mode<synchronous>, transform_indices = @transform_4, window_bounds = array<i64: 1, 128>}, {pipeline_mode = #tpu.pipeline_mode<synchronous>, transform_indices = @transform_5, window_bounds = array<i64: 128, 64>}, {pipeline_mode = #tpu.pipeline_mode<synchronous>, transform_indices = @transform_6, window_bounds = array<i64: 1, 64>}, {pipeline_mode = #tpu.pipeline_mode<synchronous>, transform_indices = @transform_7, window_bounds = array<i64: 64, 128>}, {pipeline_mode = #tpu.pipeline_mode<synchronous>, transform_indices = @transform_8, window_bounds = array<i64: 1, 128>}, {pipeline_mode = #tpu.pipeline_mode<synchronous>, transform_indices = @transform_9, window_bounds = array<i64: 128, 8>}, {pipeline_mode = #tpu.pipeline_mode<synchronous>, transform_indices = @transform_10, window_bounds = array<i64: 1, 8>}, {transform_indices = @transform_11, window_bounds = array<i64: 16, 128>}]} {
    %c0 = arith.constant 0 : index
    %c0_0 = arith.constant 0 : index
    %0 = vector.load %arg1[%c0, %c0_0] : memref<16x512xbf16, #tpu.memory_space<vmem>>, vector<16x512xbf16>
    %c0_1 = arith.constant 0 : index
    %c0_2 = arith.constant 0 : index
    %1 = vector.load %arg2[%c0_1, %c0_2] : memref<128x144xbf16, #tpu.memory_space<vmem>>, vector<128x144xbf16>
    %2 = vector.extract_strided_slice %0 {offsets = [0, 0], sizes = [16, 128], strides = [1, 1]} : vector<16x512xbf16> to vector<16x128xbf16>
    %cst = arith.constant dense<0.000000e+00> : vector<16x144xf32>
    %3 = tpu.matmul %2, %1, %cst {dimension_numbers = #tpu.dot_dimension_numbers<[1], [0], [0], [1], [0, 0, 1, 1], [], []>} : vector<16x128xbf16>, vector<128x144xbf16>, vector<16x144xf32> -> vector<16x144xf32>
    %4 = vector.extract_strided_slice %0 {offsets = [0, 128], sizes = [16, 128], strides = [1, 1]} : vector<16x512xbf16> to vector<16x128xbf16>
    %cst_3 = arith.constant dense<0.000000e+00> : vector<16x144xf32>
    %5 = tpu.matmul %4, %1, %cst_3 {dimension_numbers = #tpu.dot_dimension_numbers<[1], [0], [0], [1], [0, 0, 1, 1], [], []>} : vector<16x128xbf16>, vector<128x144xbf16>, vector<16x144xf32> -> vector<16x144xf32>
    %6 = arith.maximumf %3, %5 : vector<16x144xf32>
    %7 = vector.extract_strided_slice %0 {offsets = [0, 256], sizes = [16, 128], strides = [1, 1]} : vector<16x512xbf16> to vector<16x128xbf16>
    %cst_4 = arith.constant dense<0.000000e+00> : vector<16x144xf32>
    %8 = tpu.matmul %7, %1, %cst_4 {dimension_numbers = #tpu.dot_dimension_numbers<[1], [0], [0], [1], [0, 0, 1, 1], [], []>} : vector<16x128xbf16>, vector<128x144xbf16>, vector<16x144xf32> -> vector<16x144xf32>
    %9 = vector.extract_strided_slice %0 {offsets = [0, 384], sizes = [16, 128], strides = [1, 1]} : vector<16x512xbf16> to vector<16x128xbf16>
    %cst_5 = arith.constant dense<0.000000e+00> : vector<16x144xf32>
    %10 = tpu.matmul %9, %1, %cst_5 {dimension_numbers = #tpu.dot_dimension_numbers<[1], [0], [0], [1], [0, 0, 1, 1], [], []>} : vector<16x128xbf16>, vector<128x144xbf16>, vector<16x144xf32> -> vector<16x144xf32>
    %11 = arith.maximumf %8, %10 : vector<16x144xf32>
    %12 = arith.maximumf %6, %11 : vector<16x144xf32>
    %c0_6 = arith.constant 0 : index
    %c0_7 = arith.constant 0 : index
    %13 = vector.load %arg3[%c0_6, %c0_7] : memref<1x144xf32, #tpu.memory_space<vmem>>, vector<1x144xf32>
    %14 = vector.broadcast %13 : vector<1x144xf32> to vector<16x144xf32>
    %15 = arith.addf %12, %14 : vector<16x144xf32>
    %cst_8 = arith.constant 0.000000e+00 : f32
    %16 = vector.broadcast %cst_8 : f32 to vector<16x144xf32>
    %17 = arith.maximumf %15, %16 : vector<16x144xf32>
    %18 = arith.truncf %17 : vector<16x144xf32> to vector<16x144xbf16>
    %c0_9 = arith.constant 0 : index
    %c0_10 = arith.constant 0 : index
    %19 = vector.load %arg4[%c0_9, %c0_10] : memref<144x128xbf16, #tpu.memory_space<vmem>>, vector<144x128xbf16>
    %cst_11 = arith.constant dense<0.000000e+00> : vector<16x128xf32>
    %20 = tpu.matmul %18, %19, %cst_11 {dimension_numbers = #tpu.dot_dimension_numbers<[1], [0], [0], [1], [0, 0, 1, 1], [], []>} : vector<16x144xbf16>, vector<144x128xbf16>, vector<16x128xf32> -> vector<16x128xf32>
    %c0_12 = arith.constant 0 : index
    %c0_13 = arith.constant 0 : index
    %21 = vector.load %arg5[%c0_12, %c0_13] : memref<1x128xf32, #tpu.memory_space<vmem>>, vector<1x128xf32>
    %22 = vector.broadcast %21 : vector<1x128xf32> to vector<16x128xf32>
    %23 = arith.addf %20, %22 : vector<16x128xf32>
    %cst_14 = arith.constant 0.000000e+00 : f32
    %24 = vector.broadcast %cst_14 : f32 to vector<16x128xf32>
    %25 = arith.maximumf %23, %24 : vector<16x128xf32>
    %26 = arith.truncf %25 : vector<16x128xf32> to vector<16x128xbf16>
    %c0_15 = arith.constant 0 : index
    %c0_16 = arith.constant 0 : index
    %27 = vector.load %arg6[%c0_15, %c0_16] : memref<128x64xbf16, #tpu.memory_space<vmem>>, vector<128x64xbf16>
    %cst_17 = arith.constant dense<0.000000e+00> : vector<16x64xf32>
    %28 = tpu.matmul %26, %27, %cst_17 {dimension_numbers = #tpu.dot_dimension_numbers<[1], [0], [0], [1], [0, 0, 1, 1], [], []>} : vector<16x128xbf16>, vector<128x64xbf16>, vector<16x64xf32> -> vector<16x64xf32>
    %c0_18 = arith.constant 0 : index
    %c0_19 = arith.constant 0 : index
    %29 = vector.load %arg7[%c0_18, %c0_19] : memref<1x64xf32, #tpu.memory_space<vmem>>, vector<1x64xf32>
    %30 = vector.broadcast %29 : vector<1x64xf32> to vector<16x64xf32>
    %31 = arith.addf %28, %30 : vector<16x64xf32>
    %cst_20 = arith.constant 0.000000e+00 : f32
    %32 = vector.broadcast %cst_20 : f32 to vector<16x64xf32>
    %33 = arith.maximumf %31, %32 : vector<16x64xf32>
    %c0_21 = arith.constant 0 : index
    %c0_22 = arith.constant 0 : index
    %34 = vector.load %arg8[%c0_21, %c0_22] : memref<64x128xf32, #tpu.memory_space<vmem>>, vector<64x128xf32>
    %cst_23 = arith.constant dense<0.000000e+00> : vector<16x128xf32>
    %35 = tpu.matmul %33, %34, %cst_23 {dimension_numbers = #tpu.dot_dimension_numbers<[1], [0], [0], [1], [0, 0, 1, 1], [], []>} : vector<16x64xf32>, vector<64x128xf32>, vector<16x128xf32> -> vector<16x128xf32>
    %c0_24 = arith.constant 0 : index
    %c0_25 = arith.constant 0 : index
    %36 = vector.load %arg9[%c0_24, %c0_25] : memref<1x128xf32, #tpu.memory_space<vmem>>, vector<1x128xf32>
    %37 = vector.broadcast %36 : vector<1x128xf32> to vector<16x128xf32>
    %38 = arith.addf %35, %37 : vector<16x128xf32>
    %39 = math.tanh %38 : vector<16x128xf32>
    %c0_26 = arith.constant 0 : index
    %c0_27 = arith.constant 0 : index
    %40 = vector.load %arg10[%c0_26, %c0_27] : memref<128x8xf32, #tpu.memory_space<vmem>>, vector<128x8xf32>
    %cst_28 = arith.constant dense<0.000000e+00> : vector<16x8xf32>
    %41 = tpu.matmul %39, %40, %cst_28 {dimension_numbers = #tpu.dot_dimension_numbers<[1], [0], [0], [1], [0, 0, 1, 1], [], []>} : vector<16x128xf32>, vector<128x8xf32>, vector<16x8xf32> -> vector<16x8xf32>
    %c0_29 = arith.constant 0 : index
    %c0_30 = arith.constant 0 : index
    %42 = vector.load %arg11[%c0_29, %c0_30] : memref<1x8xf32, #tpu.memory_space<vmem>>, vector<1x8xf32>
    %43 = vector.broadcast %42 : vector<1x8xf32> to vector<16x8xf32>
    %44 = arith.addf %41, %43 : vector<16x8xf32>
    %45 = vector.extract_strided_slice %44 {offsets = [0, 0], sizes = [16, 7], strides = [1, 1]} : vector<16x8xf32> to vector<16x7xf32>
    %46 = vector.extract_strided_slice %44 {offsets = [0, 7], sizes = [16, 1], strides = [1, 1]} : vector<16x8xf32> to vector<16x1xf32>
    %cst_31 = arith.constant dense<0xFF800000> : vector<16xf32>
    %47 = vector.multi_reduction <maximumf>, %45, %cst_31 [1] : vector<16x7xf32> to vector<16xf32>
    %48 = vector.shape_cast %47 : vector<16xf32> to vector<16x1xf32>
    %49 = vector.broadcast %48 : vector<16x1xf32> to vector<16x7xf32>
    %50 = arith.subf %45, %49 : vector<16x7xf32>
    %51 = math.exp %50 : vector<16x7xf32>
    %52 = vector.broadcast %48 : vector<16x1xf32> to vector<16x7xf32>
    %53 = arith.subf %45, %52 : vector<16x7xf32>
    %cst_32 = arith.constant dense<0.000000e+00> : vector<16xf32>
    %54 = vector.multi_reduction <add>, %51, %cst_32 [1] : vector<16x7xf32> to vector<16xf32>
    %55 = vector.shape_cast %54 : vector<16xf32> to vector<16x1xf32>
    %56 = math.log %55 : vector<16x1xf32>
    %57 = vector.broadcast %56 : vector<16x1xf32> to vector<16x7xf32>
    %58 = arith.subf %53, %57 : vector<16x7xf32>
    %cst_33 = arith.constant 0.000000e+00 : f32
    %59 = vector.broadcast %cst_33 : f32 to vector<16x120xf32>
    %60 = tpu.concatenate %58, %46, %59 in 1 : vector<16x7xf32>, vector<16x1xf32>, vector<16x120xf32> -> vector<16x128xf32>
    %c0_34 = arith.constant 0 : index
    %c0_35 = arith.constant 0 : index
    %61 = vector.load %arg12[%c0_34, %c0_35] : memref<16x128xf32, #tpu.memory_space<vmem>>, vector<16x128xf32>
    tpu.vector_store %arg12[%c0_34, %c0_35], %60 {strides = array<i32>} : memref<16x128xf32, #tpu.memory_space<vmem>>, vector<16x128xf32>,
    return
  }
  func.func @transform_0(%arg0: i32) -> (i32, i32) {
    %c0_i32 = arith.constant 0 : i32
    %c0_i32_0 = arith.constant 0 : i32
    return %arg0, %c0_i32 : i32, i32
  }
  func.func @transform_1(%arg0: i32) -> (i32, i32) {
    %c0_i32 = arith.constant 0 : i32
    %c0_i32_0 = arith.constant 0 : i32
    %c0_i32_1 = arith.constant 0 : i32
    return %c0_i32, %c0_i32_0 : i32, i32
  }
  func.func @transform_2(%arg0: i32) -> (i32, i32) {
    %c0_i32 = arith.constant 0 : i32
    %c0_i32_0 = arith.constant 0 : i32
    %c0_i32_1 = arith.constant 0 : i32
    return %c0_i32, %c0_i32_0 : i32, i32
  }
  func.func @transform_3(%arg0: i32) -> (i32, i32) {
    %c0_i32 = arith.constant 0 : i32
    %c0_i32_0 = arith.constant 0 : i32
    %c0_i32_1 = arith.constant 0 : i32
    return %c0_i32, %c0_i32_0 : i32, i32
  }
  func.func @transform_4(%arg0: i32) -> (i32, i32) {
    %c0_i32 = arith.constant 0 : i32
    %c0_i32_0 = arith.constant 0 : i32
    %c0_i32_1 = arith.constant 0 : i32
    return %c0_i32, %c0_i32_0 : i32, i32
  }
  func.func @transform_5(%arg0: i32) -> (i32, i32) {
    %c0_i32 = arith.constant 0 : i32
    %c0_i32_0 = arith.constant 0 : i32
    %c0_i32_1 = arith.constant 0 : i32
    return %c0_i32, %c0_i32_0 : i32, i32
  }
  func.func @transform_6(%arg0: i32) -> (i32, i32) {
    %c0_i32 = arith.constant 0 : i32
    %c0_i32_0 = arith.constant 0 : i32
    %c0_i32_1 = arith.constant 0 : i32
    return %c0_i32, %c0_i32_0 : i32, i32
  }
  func.func @transform_7(%arg0: i32) -> (i32, i32) {
    %c0_i32 = arith.constant 0 : i32
    %c0_i32_0 = arith.constant 0 : i32
    %c0_i32_1 = arith.constant 0 : i32
    return %c0_i32, %c0_i32_0 : i32, i32
  }
  func.func @transform_8(%arg0: i32) -> (i32, i32) {
    %c0_i32 = arith.constant 0 : i32
    %c0_i32_0 = arith.constant 0 : i32
    %c0_i32_1 = arith.constant 0 : i32
    return %c0_i32, %c0_i32_0 : i32, i32
  }
  func.func @transform_9(%arg0: i32) -> (i32, i32) {
    %c0_i32 = arith.constant 0 : i32
    %c0_i32_0 = arith.constant 0 : i32
    %c0_i32_1 = arith.constant 0 : i32
    return %c0_i32, %c0_i32_0 : i32, i32
  }
  func.func @transform_10(%arg0: i32) -> (i32, i32) {
    %c0_i32 = arith.constant 0 : i32
    %c0_i32_0 = arith.constant 0 : i32
    %c0_i32_1 = arith.constant 0 : i32
    return %c0_i32, %c0_i32_0 : i32, i32
  }
  func.func @transform_11(%arg0: i32) -> (i32, i32) {
    %c0_i32 = arith.constant 0 : i32
    %c0_i32_0 = arith.constant 0 : i32
    return %arg0, %c0_i32 : i32, i32
  }
}

</mosaic_0001>

<llo_original>
// kernel: ac_model_forward.1
$region0: #{ac_model_forward.1}
  #allocation0 [shape = 'u32[]', space=smem, size = 0x4, offset = 0x4, fixed_abs, tag = 'smem constant byte address 0x4 - core index']
  #allocation1 [shape = 'u32[144,128]{1,0:T(1,128)}', space=vmem, size = 0x12000, scoped, tag = 'internal scratch']
  %s0 = inlined_call_operand.vmem [shape: bf16[16,512], index: 0, kind: input, shape index: {}]
  %s1 = inlined_call_operand.vmem [shape: bf16[128,144], index: 1, kind: input, shape index: {}]
  %s2 = inlined_call_operand.vmem [shape: f32[1,144], index: 2, kind: input, shape index: {}]
  %s3 = inlined_call_operand.vmem [shape: bf16[144,128], index: 3, kind: input, shape index: {}]
  %s4 = inlined_call_operand.vmem [shape: f32[1,128], index: 4, kind: input, shape index: {}]
  %s5 = inlined_call_operand.vmem [shape: bf16[128,64], index: 5, kind: input, shape index: {}]
  %s6 = inlined_call_operand.vmem [shape: f32[1,64], index: 6, kind: input, shape index: {}]
  %s7 = inlined_call_operand.vmem [shape: f32[64,128], index: 7, kind: input, shape index: {}]
  %s8 = inlined_call_operand.vmem [shape: f32[1,128], index: 8, kind: input, shape index: {}]
  %s9 = inlined_call_operand.vmem [shape: f32[128,8], index: 9, kind: input, shape index: {}]
  %s10 = inlined_call_operand.vmem [shape: f32[1,8], index: 10, kind: input, shape index: {}]
  %s11 = inlined_call_operand.vmem [shape: f32[16,128], index: 11, kind: output, shape index: {}]
  %s12 = sld [smem:[#allocation0]]
  $region54: #{ac_model_forward.1} parent=0
    _
  %s14 = ssub.s32 1, %s12
  %s15 = scalar_select 0, %s14, %s12
  // Predicated region
  $region2: #{ac_model_forward.1} parent=0 // pred_check
    _
  $region3: #{ac_model_forward.1} parent=0 // pred_check_branch
    %17 = sbr.rel (0) target = $region5
  $region4: #{ac_model_forward.1} parent=0 // pred_region
    _
  $region5: #{ac_model_forward.1} parent=0 // pred_fallthru
    _
  // Predicated region
  $region6: #{ac_model_forward.1} parent=0 // pred_check
    _
  $region7: #{ac_model_forward.1} parent=0 // pred_check_branch
    %19 = sbr.rel (0) target = $region9
  $region8: #{ac_model_forward.1} parent=0 // pred_region
    _
  $region9: #{ac_model_forward.1} parent=0 // pred_fallthru
    _
  // Predicated region
  $region10: #{ac_model_forward.1} parent=0 // pred_check
    _
  $region11: #{ac_model_forward.1} parent=0 // pred_check_branch
    %21 = sbr.rel (0) target = $region13
  $region12: #{ac_model_forward.1} parent=0 // pred_region
    _
  $region13: #{ac_model_forward.1} parent=0 // pred_fallthru
    _
  // Predicated region
  $region14: #{ac_model_forward.1} parent=0 // pred_check
    _
  $region15: #{ac_model_forward.1} parent=0 // pred_check_branch
    %23 = sbr.rel (0) target = $region17
  $region16: #{ac_model_forward.1} parent=0 // pred_region
    _
  $region17: #{ac_model_forward.1} parent=0 // pred_fallthru
    _
  // Predicated region
  $region18: #{ac_model_forward.1} parent=0 // pred_check
    _
  $region19: #{ac_model_forward.1} parent=0 // pred_check_branch
    %25 = sbr.rel (0) target = $region21
  $region20: #{ac_model_forward.1} parent=0 // pred_region
    _
  $region21: #{ac_model_forward.1} parent=0 // pred_fallthru
    _
  // Predicated region
  $region22: #{ac_model_forward.1} parent=0 // pred_check
    _
  $region23: #{ac_model_forward.1} parent=0 // pred_check_branch
    %27 = sbr.rel (0) target = $region25
  $region24: #{ac_model_forward.1} parent=0 // pred_region
    _
  $region25: #{ac_model_forward.1} parent=0 // pred_fallthru
    _
  // Predicated region
  $region26: #{ac_model_forward.1} parent=0 // pred_check
    _
  $region27: #{ac_model_forward.1} parent=0 // pred_check_branch
    %29 = sbr.rel (0) target = $region29
  $region28: #{ac_model_forward.1} parent=0 // pred_region
    _
  $region29: #{ac_model_forward.1} parent=0 // pred_fallthru
    _
  // Predicated region
  $region30: #{ac_model_forward.1} parent=0 // pred_check
    _
  $region31: #{ac_model_forward.1} parent=0 // pred_check_branch
    %31 = sbr.rel (0) target = $region33
  $region32: #{ac_model_forward.1} parent=0 // pred_region
    _
  $region33: #{ac_model_forward.1} parent=0 // pred_fallthru
    _
  // Predicated region
  $region34: #{ac_model_forward.1} parent=0 // pred_check
    _
  $region35: #{ac_model_forward.1} parent=0 // pred_check_branch
    %33 = sbr.rel (0) target = $region37
  $region36: #{ac_model_forward.1} parent=0 // pred_region
    _
  $region37: #{ac_model_forward.1} parent=0 // pred_fallthru
    _
  // Predicated region
  $region38: #{ac_model_forward.1} parent=0 // pred_check
    _
  $region39: #{ac_model_forward.1} parent=0 // pred_check_branch
    %35 = sbr.rel (0) target = $region41
  $region40: #{ac_model_forward.1} parent=0 // pred_region
    _
  $region41: #{ac_model_forward.1} parent=0 // pred_fallthru
    _
  // Predicated region
  $region42: #{ac_model_forward.1} parent=0 // pred_check
    _
  $region43: #{ac_model_forward.1} parent=0 // pred_check_branch
    %37 = sbr.rel (0) target = $region45
  $region44: #{ac_model_forward.1} parent=0 // pred_region
    _
  $region45: #{ac_model_forward.1} parent=0 // pred_fallthru
    _
  %v39 = vld [vmem:[%s0] sm:$0xff]
  %v40 = vld [vmem:[%s0 + $0x8] sm:$0xff]
  %v41 = vld [vmem:[%s0 + $0x10] sm:$0xff]
  %v42 = vld [vmem:[%s0 + $0x18] sm:$0xff]
  %v43 = vld [vmem:[%s1] sm:$0xff]
  %v44 = vld [vmem:[%s1 + $0x8] sm:$0xff]
  %v45 = vld [vmem:[%s1 + $0x10] sm:$0xff]
  %v46 = vld [vmem:[%s1 + $0x18] sm:$0xff]
  %v47 = vld [vmem:[%s1 + $0x20] sm:$0xff]
  %v48 = vld [vmem:[%s1 + $0x28] sm:$0xff]
  %v49 = vld [vmem:[%s1 + $0x30] sm:$0xff]
  %v50 = vld [vmem:[%s1 + $0x38] sm:$0xff]
  %v51 = vld [vmem:[%s1 + $0x40] sm:$0xff]
  %v52 = vld [vmem:[%s1 + $0x48] sm:$0xff]
  %v53 = vld [vmem:[%s1 + $0x50] sm:$0xff]
  %v54 = vld [vmem:[%s1 + $0x58] sm:$0xff]
  %v55 = vld [vmem:[%s1 + $0x60] sm:$0xff]
  %v56 = vld [vmem:[%s1 + $0x68] sm:$0xff]
  %v57 = vld [vmem:[%s1 + $0x70] sm:$0xff]
  %v58 = vld [vmem:[%s1 + $0x78] sm:$0xff]
  %v61 = vunpack.c.l.b16 %v39
  %v62 = vunpack.c.l.b16 %v41
  %v63 = vpack.c.b16 %v62, %v61
  %v81 = vunpack.c.l.b16 %v43
  %v82 = vunpack.c.h.b16 %v43
  %v83 = vunpack.c.l.b16 %v44
  %v84 = vunpack.c.h.b16 %v44
  %v85 = vunpack.c.l.b16 %v45
  %v86 = vunpack.c.h.b16 %v45
  %v87 = vunpack.c.l.b16 %v46
  %v88 = vunpack.c.h.b16 %v46
  %v89 = vunpack.c.l.b16 %v47
  %v90 = vunpack.c.h.b16 %v47
  %v91 = vunpack.c.l.b16 %v48
  %v92 = vunpack.c.h.b16 %v48
  %v93 = vunpack.c.l.b16 %v49
  %v94 = vunpack.c.h.b16 %v49
  %v95 = vunpack.c.l.b16 %v50
  %v96 = vunpack.c.h.b16 %v50
  %v97 = vunpack.c.l.b16 %v51
  %v98 = vunpack.c.h.b16 %v51
  %v99 = vunpack.c.l.b16 %v52
  %v100 = vunpack.c.h.b16 %v52
  %v101 = vunpack.c.l.b16 %v53
  %v102 = vunpack.c.h.b16 %v53
  %v103 = vunpack.c.l.b16 %v54
  %v104 = vunpack.c.h.b16 %v54
  %v105 = vunpack.c.l.b16 %v55
  %v106 = vunpack.c.h.b16 %v55
  %v107 = vunpack.c.l.b16 %v56
  %v108 = vunpack.c.h.b16 %v56
  %v109 = vunpack.c.l.b16 %v57
  %v110 = vunpack.c.h.b16 %v57
  %v111 = vunpack.c.l.b16 %v58
  %v112 = vunpack.c.h.b16 %v58
  %v113 = vpack.c.b16 %v83, %v81
  %v114 = vpack.c.b16 %v84, %v82
  %v115 = vpack.c.b16 %v87, %v85
  %v116 = vpack.c.b16 %v88, %v86
  %v117 = vpack.c.b16 %v91, %v89
  %v118 = vpack.c.b16 %v92, %v90
  %v119 = vpack.c.b16 %v95, %v93
  %v120 = vpack.c.b16 %v96, %v94
  %v121 = vpack.c.b16 %v99, %v97
  %v122 = vpack.c.b16 %v100, %v98
  %v123 = vpack.c.b16 %v103, %v101
  %v124 = vpack.c.b16 %v104, %v102
  %v125 = vpack.c.b16 %v107, %v105
  %v126 = vpack.c.b16 %v108, %v106
  %v127 = vpack.c.b16 %v111, %v109
  %v128 = vpack.c.b16 %v112, %v110
  %145 = vmatprep.subr.bf16.mxu0 %v114
  %146 = vmatpush1.bf16.msra.mxu0 %v113
  %147 = vmatprep.subr.bf16.mxu0 %v116
  %148 = vmatpush1.bf16.msra.mxu0 %v115
  %149 = vmatprep.subr.bf16.mxu0 %v118
  %150 = vmatpush1.bf16.msra.mxu0 %v117
  %151 = vmatprep.subr.bf16.mxu0 %v120
  %152 = vmatpush1.bf16.msra.mxu0 %v119
  %153 = vmatprep.subr.bf16.mxu0 %v122
  %154 = vmatpush1.bf16.msra.mxu0 %v121
  %155 = vmatprep.subr.bf16.mxu0 %v124
  %156 = vmatpush1.bf16.msra.mxu0 %v123
  %157 = vmatprep.subr.bf16.mxu0 %v126
  %158 = vmatpush1.bf16.msra.mxu0 %v125
  %159 = vmatprep.subr.bf16.mxu0 %v128
  %160 = vmatpush1.bf16.msra.mxu0 %v127
  %161 = vmatprep.subr.bf16.mxu0 0
  %162 = vmatpush1.bf16.msra.mxu0 0
  %163 = vmatprep.subr.bf16.mxu0 0
  %164 = vmatpush1.bf16.msra.mxu0 0
  %165 = vmatprep.subr.bf16.mxu0 0
  %166 = vmatpush1.bf16.msra.mxu0 0
  %167 = vmatprep.subr.bf16.mxu0 0
  %168 = vmatpush1.bf16.msra.mxu0 0
  %169 = vmatprep.subr.bf16.mxu0 0
  %170 = vmatpush1.bf16.msra.mxu0 0
  %171 = vmatprep.subr.bf16.mxu0 0
  %172 = vmatpush1.bf16.msra.mxu0 0
  %173 = vmatprep.subr.bf16.mxu0 0
  %174 = vmatpush1.bf16.msra.mxu0 0
  %175 = vmatprep.subr.bf16.mxu0 0
  %176 = vmatpush1.bf16.msra.mxu0 0
  %177 = vmatprep.mubr.bf16.mxu0 0
  %178 = vmatmul.mubr.bf16.gmra.mrb[0].mxu0 %v63
  %v179 = vpop.f32.mrb[0].mxu0
  %v180 = vadd.f32 0.0, %v179
  %v181 = vpop.f32.mrb[0].mxu0
  %v182 = vadd.f32 0.0, %v181
  %v183 = vpop.f32.mrb[0].mxu0
  %v184 = vadd.f32 0.0, %v183
  %v185 = vpop.f32.mrb[0].mxu0
  %v186 = vadd.f32 0.0, %v185
  %187 = vdwg.mxu0
  %v188 = vunpack.c.h.b16 %v39
  %v189 = vunpack.c.h.b16 %v41
  %v190 = vpack.c.b16 %v189, %v188
  %192 = vmatprep.subr.bf16.mxu0 %v114
  %193 = vmatpush1.bf16.msra.mxu0 %v113
  %194 = vmatprep.subr.bf16.mxu0 %v116
  %195 = vmatpush1.bf16.msra.mxu0 %v115
  %196 = vmatprep.subr.bf16.mxu0 %v118
  %197 = vmatpush1.bf16.msra.mxu0 %v117
  %198 = vmatprep.subr.bf16.mxu0 %v120
  %199 = vmatpush1.bf16.msra.mxu0 %v119
  %200 = vmatprep.subr.bf16.mxu0 %v122
  %201 = vmatpush1.bf16.msra.mxu0 %v121
  %202 = vmatprep.subr.bf16.mxu0 %v124
  %203 = vmatpush1.bf16.msra.mxu0 %v123
  %204 = vmatprep.subr.bf16.mxu0 %v126
  %205 = vmatpush1.bf16.msra.mxu0 %v125
  %206 = vmatprep.subr.bf16.mxu0 %v128
  %207 = vmatpush1.bf16.msra.mxu0 %v127
  %208 = vmatprep.subr.bf16.mxu0 0
  %209 = vmatpush1.bf16.msra.mxu0 0
  %210 = vmatprep.subr.bf16.mxu0 0
  %211 = vmatpush1.bf16.msra.mxu0 0
  %212 = vmatprep.subr.bf16.mxu0 0
  %213 = vmatpush1.bf16.msra.mxu0 0
  %214 = vmatprep.subr.bf16.mxu0 0
  %215 = vmatpush1.bf16.msra.mxu0 0
  %216 = vmatprep.subr.bf16.mxu0 0
  %217 = vmatpush1.bf16.msra.mxu0 0
  %218 = vmatprep.subr.bf16.mxu0 0
  %219 = vmatpush1.bf16.msra.mxu0 0
  %220 = vmatprep.subr.bf16.mxu0 0
  %221 = vmatpush1.bf16.msra.mxu0 0
  %222 = vmatprep.subr.bf16.mxu0 0
  %223 = vmatpush1.bf16.msra.mxu0 0
  %224 = vmatprep.mubr.bf16.mxu0 0
  %225 = vmatmul.mubr.bf16.gmra.mrb[0].mxu0 %v190
  %v226 = vpop.f32.mrb[0].mxu0
  %v227 = vadd.f32 0.0, %v226
  %v228 = vpop.f32.mrb[0].mxu0
  %v229 = vadd.f32 0.0, %v228
  %v230 = vpop.f32.mrb[0].mxu0
  %v231 = vadd.f32 0.0, %v230
  %v232 = vpop.f32.mrb[0].mxu0
  %v233 = vadd.f32 0.0, %v232
  %234 = vdwg.mxu0
  %v235 = vmax.f32 %v180, %v227
  %v236 = vmax.f32 %v182, %v229
  %v237 = vmax.f32 %v184, %v231
  %v238 = vmax.f32 %v186, %v233
  %v241 = vunpack.c.l.b16 %v40
  %v242 = vunpack.c.l.b16 %v42
  %v243 = vpack.c.b16 %v242, %v241
  %245 = vmatprep.subr.bf16.mxu0 %v114
  %246 = vmatpush1.bf16.msra.mxu0 %v113
  %247 = vmatprep.subr.bf16.mxu0 %v116
  %248 = vmatpush1.bf16.msra.mxu0 %v115
  %249 = vmatprep.subr.bf16.mxu0 %v118
  %250 = vmatpush1.bf16.msra.mxu0 %v117
  %251 = vmatprep.subr.bf16.mxu0 %v120
  %252 = vmatpush1.bf16.msra.mxu0 %v119
  %253 = vmatprep.subr.bf16.mxu0 %v122
  %254 = vmatpush1.bf16.msra.mxu0 %v121
  %255 = vmatprep.subr.bf16.mxu0 %v124
  %256 = vmatpush1.bf16.msra.mxu0 %v123
  %257 = vmatprep.subr.bf16.mxu0 %v126
  %258 = vmatpush1.bf16.msra.mxu0 %v125
  %259 = vmatprep.subr.bf16.mxu0 %v128
  %260 = vmatpush1.bf16.msra.mxu0 %v127
  %261 = vmatprep.subr.bf16.mxu0 0
  %262 = vmatpush1.bf16.msra.mxu0 0
  %263 = vmatprep.subr.bf16.mxu0 0
  %264 = vmatpush1.bf16.msra.mxu0 0
  %265 = vmatprep.subr.bf16.mxu0 0
  %266 = vmatpush1.bf16.msra.mxu0 0
  %267 = vmatprep.subr.bf16.mxu0 0
  %268 = vmatpush1.bf16.msra.mxu0 0
  %269 = vmatprep.subr.bf16.mxu0 0
  %270 = vmatpush1.bf16.msra.mxu0 0
  %271 = vmatprep.subr.bf16.mxu0 0
  %272 = vmatpush1.bf16.msra.mxu0 0
  %273 = vmatprep.subr.bf16.mxu0 0
  %274 = vmatpush1.bf16.msra.mxu0 0
  %275 = vmatprep.subr.bf16.mxu0 0
  %276 = vmatpush1.bf16.msra.mxu0 0
  %277 = vmatprep.mubr.bf16.mxu0 0
  %278 = vmatmul.mubr.bf16.gmra.mrb[0].mxu0 %v243
  %v279 = vpop.f32.mrb[0].mxu0
  %v280 = vadd.f32 0.0, %v279
  %v281 = vpop.f32.mrb[0].mxu0
  %v282 = vadd.f32 0.0, %v281
  %v283 = vpop.f32.mrb[0].mxu0
  %v284 = vadd.f32 0.0, %v283
  %v285 = vpop.f32.mrb[0].mxu0
  %v286 = vadd.f32 0.0, %v285
  %287 = vdwg.mxu0
  %v288 = vunpack.c.h.b16 %v40
  %v289 = vunpack.c.h.b16 %v42
  %v290 = vpack.c.b16 %v289, %v288
  %292 = vmatprep.subr.bf16.mxu0 %v114
  %293 = vmatpush1.bf16.msra.mxu0 %v113
  %294 = vmatprep.subr.bf16.mxu0 %v116
  %295 = vmatpush1.bf16.msra.mxu0 %v115
  %296 = vmatprep.subr.bf16.mxu0 %v118
  %297 = vmatpush1.bf16.msra.mxu0 %v117
  %298 = vmatprep.subr.bf16.mxu0 %v120
  %299 = vmatpush1.bf16.msra.mxu0 %v119
  %300 = vmatprep.subr.bf16.mxu0 %v122
  %301 = vmatpush1.bf16.msra.mxu0 %v121
  %302 = vmatprep.subr.bf16.mxu0 %v124
  %303 = vmatpush1.bf16.msra.mxu0 %v123
  %304 = vmatprep.subr.bf16.mxu0 %v126
  %305 = vmatpush1.bf16.msra.mxu0 %v125
  %306 = vmatprep.subr.bf16.mxu0 %v128
  %307 = vmatpush1.bf16.msra.mxu0 %v127
  %308 = vmatprep.subr.bf16.mxu0 0
  %309 = vmatpush1.bf16.msra.mxu0 0
  %310 = vmatprep.subr.bf16.mxu0 0
  %311 = vmatpush1.bf16.msra.mxu0 0
  %312 = vmatprep.subr.bf16.mxu0 0
  %313 = vmatpush1.bf16.msra.mxu0 0
  %314 = vmatprep.subr.bf16.mxu0 0
  %315 = vmatpush1.bf16.msra.mxu0 0
  %316 = vmatprep.subr.bf16.mxu0 0
  %317 = vmatpush1.bf16.msra.mxu0 0
  %318 = vmatprep.subr.bf16.mxu0 0
  %319 = vmatpush1.bf16.msra.mxu0 0
  %320 = vmatprep.subr.bf16.mxu0 0
  %321 = vmatpush1.bf16.msra.mxu0 0
  %322 = vmatprep.subr.bf16.mxu0 0
  %323 = vmatpush1.bf16.msra.mxu0 0
  %324 = vmatprep.mubr.bf16.mxu0 0
  %325 = vmatmul.mubr.bf16.gmra.mrb[0].mxu0 %v290
  %v326 = vpop.f32.mrb[0].mxu0
  %v327 = vadd.f32 0.0, %v326
  %v328 = vpop.f32.mrb[0].mxu0
  %v329 = vadd.f32 0.0, %v328
  %v330 = vpop.f32.mrb[0].mxu0
  %v331 = vadd.f32 0.0, %v330
  %v332 = vpop.f32.mrb[0].mxu0
  %v333 = vadd.f32 0.0, %v332
  %334 = vdwg.mxu0
  %v335 = vmax.f32 %v280, %v327
  %v336 = vmax.f32 %v282, %v329
  %v337 = vmax.f32 %v284, %v331
  %v338 = vmax.f32 %v286, %v333
  %v339 = vmax.f32 %v235, %v335
  %v340 = vmax.f32 %v236, %v336
  %v341 = vmax.f32 %v237, %v337
  %v342 = vmax.f32 %v238, %v338
  %v343 = vld [vmem:[%s2] sm:$0x3]
  %v345 = vlaneseq
  %v346 = vshrl.u32 %v345, 7
  %v347 = vsub.s32 0, %v346
  %v348 = vrot.slane %v343, %v347
  %v349 = vlaneseq
  %v350 = vshrl.u32 %v349, 7
  %v351 = vsub.s32 1, %v350
  %v352 = vrot.slane %v343, %v351
  %v355 = vadd.f32 %v339, %v348
  %v356 = vadd.f32 %v340, %v352
  %v357 = vadd.f32 %v341, %v348
  %v358 = vadd.f32 %v342, %v352
  %v359 = vmax.f32 %v355, 0.0
  %v360 = vmax.f32 %v356, 0.0
  %v361 = vmax.f32 %v357, 0.0
  %v362 = vmax.f32 %v358, 0.0
  %v363 = vpack.c.bf16 %v361, %v359
  %v364 = vpack.c.bf16 %v362, %v360
  %v365 = vld [vmem:[%s3] sm:$0xf]
  %v366 = vld [vmem:[%s3 + $0x4] sm:$0xf]
  %v367 = vld [vmem:[%s3 + $0x8] sm:$0xf]
  %v368 = vld [vmem:[%s3 + $0xc] sm:$0xf]
  %v369 = vld [vmem:[%s3 + $0x10] sm:$0xf]
  %v370 = vld [vmem:[%s3 + $0x14] sm:$0xf]
  %v371 = vld [vmem:[%s3 + $0x18] sm:$0xf]
  %v372 = vld [vmem:[%s3 + $0x1c] sm:$0xf]
  %v373 = vld [vmem:[%s3 + $0x20] sm:$0xf]
  %v374 = vld [vmem:[%s3 + $0x24] sm:$0xf]
  %v375 = vld [vmem:[%s3 + $0x28] sm:$0xf]
  %v376 = vld [vmem:[%s3 + $0x2c] sm:$0xf]
  %v377 = vld [vmem:[%s3 + $0x30] sm:$0xf]
  %v378 = vld [vmem:[%s3 + $0x34] sm:$0xf]
  %v379 = vld [vmem:[%s3 + $0x38] sm:$0xf]
  %v380 = vld [vmem:[%s3 + $0x3c] sm:$0xf]
  %v381 = vld [vmem:[%s3 + $0x40] sm:$0xf]
  %v382 = vld [vmem:[%s3 + $0x44] sm:$0xf]
  %v383 = vld [vmem:[%s4] sm:$0x1]
  %v385 = vlaneseq
  %v386 = vshrl.u32 %v385, 7
  %v387 = vsub.s32 0, %v386
  %v388 = vrot.slane %v383, %v387
  %v408 = vunpack.c.l.b16 %v365
  %v409 = vunpack.c.l.b16 %v366
  %v410 = vunpack.c.l.b16 %v367
  %v411 = vunpack.c.l.b16 %v368
  %v412 = vunpack.c.l.b16 %v369
  %v413 = vunpack.c.l.b16 %v370
  %v414 = vunpack.c.l.b16 %v371
  %v415 = vunpack.c.l.b16 %v372
  %v416 = vunpack.c.l.b16 %v373
  %v417 = vunpack.c.l.b16 %v374
  %v418 = vunpack.c.l.b16 %v375
  %v419 = vunpack.c.l.b16 %v376
  %v420 = vunpack.c.l.b16 %v377
  %v421 = vunpack.c.l.b16 %v378
  %v422 = vunpack.c.l.b16 %v379
  %v423 = vunpack.c.l.b16 %v380
  %v424 = vunpack.c.l.b16 %v381
  %v425 = vunpack.c.l.b16 %v382
  %v426 = vpack.c.b16 %v409, %v408
  %v427 = vpack.c.b16 %v411, %v410
  %v428 = vpack.c.b16 %v413, %v412
  %v429 = vpack.c.b16 %v415, %v414
  %v430 = vpack.c.b16 %v417, %v416
  %v431 = vpack.c.b16 %v419, %v418
  %v432 = vpack.c.b16 %v421, %v420
  %v433 = vpack.c.b16 %v423, %v422
  %v434 = vpack.c.b16 %v425, %v424
  %vm444 = vcmask 130048
  %v446 = vsel %vm444, %v364, 0
  %448 = vmatprep.subr.bf16.mxu0 0
  %449 = vmatpush1.bf16.msra.mxu0 %v426
  %450 = vmatprep.subr.bf16.mxu0 0
  %451 = vmatpush1.bf16.msra.mxu0 %v427
  %452 = vmatprep.subr.bf16.mxu0 0
  %453 = vmatpush1.bf16.msra.mxu0 %v428
  %454 = vmatprep.subr.bf16.mxu0 0
  %455 = vmatpush1.bf16.msra.mxu0 %v429
  %456 = vmatprep.subr.bf16.mxu0 0
  %457 = vmatpush1.bf16.msra.mxu0 %v430
  %458 = vmatprep.subr.bf16.mxu0 0
  %459 = vmatpush1.bf16.msra.mxu0 %v431
  %460 = vmatprep.subr.bf16.mxu0 0
  %461 = vmatpush1.bf16.msra.mxu0 %v432
  %462 = vmatprep.subr.bf16.mxu0 0
  %463 = vmatpush1.bf16.msra.mxu0 %v433
  %464 = vmatprep.subr.bf16.mxu0 0
  %465 = vmatpush1.bf16.msra.mxu0 %v434
  %466 = vmatprep.subr.bf16.mxu0 0
  %467 = vmatpush1.bf16.msra.mxu0 0
  %468 = vmatprep.subr.bf16.mxu0 0
  %469 = vmatpush1.bf16.msra.mxu0 0
  %470 = vmatprep.subr.bf16.mxu0 0
  %471 = vmatpush1.bf16.msra.mxu0 0
  %472 = vmatprep.subr.bf16.mxu0 0
  %473 = vmatpush1.bf16.msra.mxu0 0
  %474 = vmatprep.subr.bf16.mxu0 0
  %475 = vmatpush1.bf16.msra.mxu0 0
  %476 = vmatprep.subr.bf16.mxu0 0
  %477 = vmatpush1.bf16.msra.mxu0 0
  %478 = vmatprep.subr.bf16.mxu0 0
  %479 = vmatpush1.bf16.msra.mxu0 0
  %480 = vmatprep.mubr.bf16.mxu0 %v446
  %481 = vmatmul.mubr.bf16.gmra.mrb[0].mxu0 %v363
  %v482 = vpop.f32.mrb[0].mxu0
  %v483 = vadd.f32 %v388, %v482
  %v484 = vpop.f32.mrb[0].mxu0
  %v485 = vpop.f32.mrb[0].mxu0
  %v486 = vadd.f32 %v388, %v485
  %v487 = vpop.f32.mrb[0].mxu0
  %488 = vdwg.mxu0
  %v489 = vmax.f32 %v483, 0.0
  %v490 = vmax.f32 %v486, 0.0
  %v491 = vpack.c.bf16 %v490, %v489
  %v492 = vld [vmem:[%s5] sm:$0xf]
  %v493 = vld [vmem:[%s5 + $0x4] sm:$0xf]
  %v494 = vld [vmem:[%s5 + $0x8] sm:$0xf]
  %v495 = vld [vmem:[%s5 + $0xc] sm:$0xf]
  %v496 = vld [vmem:[%s5 + $0x10] sm:$0xf]
  %v497 = vld [vmem:[%s5 + $0x14] sm:$0xf]
  %v498 = vld [vmem:[%s5 + $0x18] sm:$0xf]
  %v499 = vld [vmem:[%s5 + $0x1c] sm:$0xf]
  %v500 = vld [vmem:[%s5 + $0x20] sm:$0xf]
  %v501 = vld [vmem:[%s5 + $0x24] sm:$0xf]
  %v502 = vld [vmem:[%s5 + $0x28] sm:$0xf]
  %v503 = vld [vmem:[%s5 + $0x2c] sm:$0xf]
  %v504 = vld [vmem:[%s5 + $0x30] sm:$0xf]
  %v505 = vld [vmem:[%s5 + $0x34] sm:$0xf]
  %v506 = vld [vmem:[%s5 + $0x38] sm:$0xf]
  %v507 = vld [vmem:[%s5 + $0x3c] sm:$0xf]
  %v508 = vld [vmem:[%s6] sm:$0x1]
  %v510 = vlaneseq
  %v511 = vshrl.u32 %v510, 7
  %v512 = vsub.s32 0, %v511
  %v513 = vrot.slane %v508, %v512
  %v531 = vunpack.c.l.b16 %v492
  %v532 = vunpack.c.l.b16 %v493
  %v533 = vunpack.c.l.b16 %v494
  %v534 = vunpack.c.l.b16 %v495
  %v535 = vunpack.c.l.b16 %v496
  %v536 = vunpack.c.l.b16 %v497
  %v537 = vunpack.c.l.b16 %v498
  %v538 = vunpack.c.l.b16 %v499
  %v539 = vunpack.c.l.b16 %v500
  %v540 = vunpack.c.l.b16 %v501
  %v541 = vunpack.c.l.b16 %v502
  %v542 = vunpack.c.l.b16 %v503
  %v543 = vunpack.c.l.b16 %v504
  %v544 = vunpack.c.l.b16 %v505
  %v545 = vunpack.c.l.b16 %v506
  %v546 = vunpack.c.l.b16 %v507
  %v547 = vpack.c.b16 %v532, %v531
  %v548 = vpack.c.b16 %v534, %v533
  %v549 = vpack.c.b16 %v536, %v535
  %v550 = vpack.c.b16 %v538, %v537
  %v551 = vpack.c.b16 %v540, %v539
  %v552 = vpack.c.b16 %v542, %v541
  %v553 = vpack.c.b16 %v544, %v543
  %v554 = vpack.c.b16 %v546, %v545
  %563 = vmatprep.subr.bf16.mxu0 0
  %564 = vmatpush1.bf16.msra.mxu0 %v547
  %565 = vmatprep.subr.bf16.mxu0 0
  %566 = vmatpush1.bf16.msra.mxu0 %v548
  %567 = vmatprep.subr.bf16.mxu0 0
  %568 = vmatpush1.bf16.msra.mxu0 %v549
  %569 = vmatprep.subr.bf16.mxu0 0
  %570 = vmatpush1.bf16.msra.mxu0 %v550
  %571 = vmatprep.subr.bf16.mxu0 0
  %572 = vmatpush1.bf16.msra.mxu0 %v551
  %573 = vmatprep.subr.bf16.mxu0 0
  %574 = vmatpush1.bf16.msra.mxu0 %v552
  %575 = vmatprep.subr.bf16.mxu0 0
  %576 = vmatpush1.bf16.msra.mxu0 %v553
  %577 = vmatprep.subr.bf16.mxu0 0
  %578 = vmatpush1.bf16.msra.mxu0 %v554
  %579 = vmatprep.subr.bf16.mxu0 0
  %580 = vmatpush1.bf16.msra.mxu0 0
  %581 = vmatprep.subr.bf16.mxu0 0
  %582 = vmatpush1.bf16.msra.mxu0 0
  %583 = vmatprep.subr.bf16.mxu0 0
  %584 = vmatpush1.bf16.msra.mxu0 0
  %585 = vmatprep.subr.bf16.mxu0 0
  %586 = vmatpush1.bf16.msra.mxu0 0
  %587 = vmatprep.subr.bf16.mxu0 0
  %588 = vmatpush1.bf16.msra.mxu0 0
  %589 = vmatprep.subr.bf16.mxu0 0
  %590 = vmatpush1.bf16.msra.mxu0 0
  %591 = vmatprep.subr.bf16.mxu0 0
  %592 = vmatpush1.bf16.msra.mxu0 0
  %593 = vmatprep.subr.bf16.mxu0 0
  %594 = vmatpush1.bf16.msra.mxu0 0
  %595 = vmatprep.mubr.bf16.mxu0 0
  %596 = vmatmul.mubr.bf16.gmra.mrb[0].mxu0 %v491
  %v597 = vpop.f32.mrb[0].mxu0
  %v598 = vadd.f32 %v513, %v597
  %v599 = vpop.f32.mrb[0].mxu0
  %v600 = vpop.f32.mrb[0].mxu0
  %v601 = vadd.f32 %v513, %v600
  %v602 = vpop.f32.mrb[0].mxu0
  %603 = vdwg.mxu0
  %v604 = vmax.f32 %v598, 0.0
  %v605 = vmax.f32 %v601, 0.0
  %v606 = vld [vmem:[%s7] sm:$0xff]
  %v607 = vld [vmem:[%s7 + $0x8] sm:$0xff]
  %v608 = vld [vmem:[%s7 + $0x10] sm:$0xff]
  %v609 = vld [vmem:[%s7 + $0x18] sm:$0xff]
  %v610 = vld [vmem:[%s7 + $0x20] sm:$0xff]
  %v611 = vld [vmem:[%s7 + $0x28] sm:$0xff]
  %v612 = vld [vmem:[%s7 + $0x30] sm:$0xff]
  %v613 = vld [vmem:[%s7 + $0x38] sm:$0xff]
  %v614 = vld [vmem:[%s8] sm:$0x1]
  %v616 = vlaneseq
  %v617 = vshrl.u32 %v616, 7
  %v618 = vsub.s32 0, %v617
  %v619 = vrot.slane %v614, %v618
  %vm621 = vcmask 523264
  %v623 = vsel %vm621, %v604, 0
  %v626 = vsel %vm621, %v605, 0
  %628 = vmatprep.subr.mxu0 0.0
  %629 = vmatpush1.msra.mxu0 %v606
  %630 = vmatprep.subr.mxu0 0.0
  %631 = vmatpush1.msra.mxu0 %v607
  %632 = vmatprep.subr.mxu0 0.0
  %633 = vmatpush1.msra.mxu0 %v608
  %634 = vmatprep.subr.mxu0 0.0
  %635 = vmatpush1.msra.mxu0 %v609
  %636 = vmatprep.subr.mxu0 0.0
  %637 = vmatpush1.msra.mxu0 %v610
  %638 = vmatprep.subr.mxu0 0.0
  %639 = vmatpush1.msra.mxu0 %v611
  %640 = vmatprep.subr.mxu0 0.0
  %641 = vmatpush1.msra.mxu0 %v612
  %642 = vmatprep.subr.mxu0 0.0
  %643 = vmatpush1.msra.mxu0 %v613
  %644 = vmatprep.subr.mxu0 0.0
  %645 = vmatpush1.msra.mxu0 0.0
  %646 = vmatprep.subr.mxu0 0.0
  %647 = vmatpush1.msra.mxu0 0.0
  %648 = vmatprep.subr.mxu0 0.0
  %649 = vmatpush1.msra.mxu0 0.0
  %650 = vmatprep.subr.mxu0 0.0
  %651 = vmatpush1.msra.mxu0 0.0
  %652 = vmatprep.subr.mxu0 0.0
  %653 = vmatpush1.msra.mxu0 0.0
  %654 = vmatprep.subr.mxu0 0.0
  %655 = vmatpush1.msra.mxu0 0.0
  %656 = vmatprep.subr.mxu0 0.0
  %657 = vmatpush1.msra.mxu0 0.0
  %658 = vmatprep.subr.mxu0 0.0
  %659 = vmatpush1.msra.mxu0 0.0
  %660 = vmatprep.subr.mxu0 0.0
  %661 = vmatpush1.msra.mxu0 0.0
  %662 = vmatprep.subr.mxu0 0.0
  %663 = vmatpush1.msra.mxu0 0.0
  %664 = vmatprep.subr.mxu0 0.0
  %665 = vmatpush1.msra.mxu0 0.0
  %666 = vmatprep.subr.mxu0 0.0
  %667 = vmatpush1.msra.mxu0 0.0
  %668 = vmatprep.subr.mxu0 0.0
  %669 = vmatpush1.msra.mxu0 0.0
  %670 = vmatprep.subr.mxu0 0.0
  %671 = vmatpush1.msra.mxu0 0.0
  %672 = vmatprep.subr.mxu0 0.0
  %673 = vmatpush1.msra.mxu0 0.0
  %674 = vmatprep.subr.mxu0 0.0
  %675 = vmatpush1.msra.mxu0 0.0
  %676 = vmatprep.subr.mxu0 0.0
  %677 = vmatpush1.msra.mxu0 0.0
  %678 = vmatprep.subr.mxu0 0.0
  %679 = vmatpush1.msra.mxu0 0.0
  %680 = vmatprep.subr.mxu0 0.0
  %681 = vmatpush1.msra.mxu0 0.0
  %682 = vmatprep.subr.mxu0 0.0
  %683 = vmatpush1.msra.mxu0 0.0
  %684 = vmatprep.subr.mxu0 0.0
  %685 = vmatpush1.msra.mxu0 0.0
  %686 = vmatprep.subr.mxu0 0.0
  %687 = vmatpush1.msra.mxu0 0.0
  %688 = vmatprep.subr.mxu0 0.0
  %689 = vmatpush1.msra.mxu0 0.0
  %690 = vmatprep.subr.mxu0 0.0
  %691 = vmatpush1.msra.mxu0 0.0
  %692 = vmatprep.mubr.f32.mxu0 0.0
  %693 = vmatmul.mubr.f32.gmra.mrb[0].mxu0 %v623
  %v694 = vpop.f32.mrb[0].mxu0
  %v695 = vadd.f32 %v619, %v694
  %v696 = vpop.f32.mrb[0].mxu0
  %697 = vmatprep.mubr.f32.mxu0 0.0
  %698 = vmatmul.mubr.f32.gmra.mrb[0].mxu0 %v626
  %v699 = vpop.f32.mrb[0].mxu0
  %v700 = vadd.f32 %v619, %v699
  %v701 = vpop.f32.mrb[0].mxu0
  %702 = vdwg.mxu0
  %v703 = vtanh.pop %v695
  %v704 = vtanh.pop %v700
  %v705 = vld [vmem:[%s9] sm:$0xff]
  %v706 = vld [vmem:[%s9 + $0x8] sm:$0xff]
  %v707 = vld [vmem:[%s9 + $0x10] sm:$0xff]
  %v708 = vld [vmem:[%s9 + $0x18] sm:$0xff]
  %v709 = vld [vmem:[%s9 + $0x20] sm:$0xff]
  %v710 = vld [vmem:[%s9 + $0x28] sm:$0xff]
  %v711 = vld [vmem:[%s9 + $0x30] sm:$0xff]
  %v712 = vld [vmem:[%s9 + $0x38] sm:$0xff]
  %v713 = vld [vmem:[%s9 + $0x40] sm:$0xff]
  %v714 = vld [vmem:[%s9 + $0x48] sm:$0xff]
  %v715 = vld [vmem:[%s9 + $0x50] sm:$0xff]
  %v716 = vld [vmem:[%s9 + $0x58] sm:$0xff]
  %v717 = vld [vmem:[%s9 + $0x60] sm:$0xff]
  %v718 = vld [vmem:[%s9 + $0x68] sm:$0xff]
  %v719 = vld [vmem:[%s9 + $0x70] sm:$0xff]
  %v720 = vld [vmem:[%s9 + $0x78] sm:$0xff]
  %v721 = vld [vmem:[%s10] sm:$0x1]
  %v723 = vlaneseq
  %v724 = vshrl.u32 %v723, 7
  %v725 = vsub.s32 0, %v724
  %v726 = vrot.slane %v721, %v725
  %728 = vmatprep.subr.mxu0 0.0
  %729 = vmatpush1.msra.mxu0 %v705
  %730 = vmatprep.subr.mxu0 0.0
  %731 = vmatpush1.msra.mxu0 %v706
  %732 = vmatprep.subr.mxu0 0.0
  %733 = vmatpush1.msra.mxu0 %v707
  %734 = vmatprep.subr.mxu0 0.0
  %735 = vmatpush1.msra.mxu0 %v708
  %736 = vmatprep.subr.mxu0 0.0
  %737 = vmatpush1.msra.mxu0 %v709
  %738 = vmatprep.subr.mxu0 0.0
  %739 = vmatpush1.msra.mxu0 %v710
  %740 = vmatprep.subr.mxu0 0.0
  %741 = vmatpush1.msra.mxu0 %v711
  %742 = vmatprep.subr.mxu0 0.0
  %743 = vmatpush1.msra.mxu0 %v712
  %744 = vmatprep.subr.mxu0 0.0
  %745 = vmatpush1.msra.mxu0 %v713
  %746 = vmatprep.subr.mxu0 0.0
  %747 = vmatpush1.msra.mxu0 %v714
  %748 = vmatprep.subr.mxu0 0.0
  %749 = vmatpush1.msra.mxu0 %v715
  %750 = vmatprep.subr.mxu0 0.0
  %751 = vmatpush1.msra.mxu0 %v716
  %752 = vmatprep.subr.mxu0 0.0
  %753 = vmatpush1.msra.mxu0 %v717
  %754 = vmatprep.subr.mxu0 0.0
  %755 = vmatpush1.msra.mxu0 %v718
  %756 = vmatprep.subr.mxu0 0.0
  %757 = vmatpush1.msra.mxu0 %v719
  %758 = vmatprep.subr.mxu0 0.0
  %759 = vmatpush1.msra.mxu0 %v720
  %760 = vmatprep.subr.mxu0 0.0
  %761 = vmatpush1.msra.mxu0 0.0
  %762 = vmatprep.subr.mxu0 0.0
  %763 = vmatpush1.msra.mxu0 0.0
  %764 = vmatprep.subr.mxu0 0.0
  %765 = vmatpush1.msra.mxu0 0.0
  %766 = vmatprep.subr.mxu0 0.0
  %767 = vmatpush1.msra.mxu0 0.0
  %768 = vmatprep.subr.mxu0 0.0
  %769 = vmatpush1.msra.mxu0 0.0
  %770 = vmatprep.subr.mxu0 0.0
  %771 = vmatpush1.msra.mxu0 0.0
  %772 = vmatprep.subr.mxu0 0.0
  %773 = vmatpush1.msra.mxu0 0.0
  %774 = vmatprep.subr.mxu0 0.0
  %775 = vmatpush1.msra.mxu0 0.0
  %776 = vmatprep.subr.mxu0 0.0
  %777 = vmatpush1.msra.mxu0 0.0
  %778 = vmatprep.subr.mxu0 0.0
  %779 = vmatpush1.msra.mxu0 0.0
  %780 = vmatprep.subr.mxu0 0.0
  %781 = vmatpush1.msra.mxu0 0.0
  %782 = vmatprep.subr.mxu0 0.0
  %783 = vmatpush1.msra.mxu0 0.0
  %784 = vmatprep.subr.mxu0 0.0
  %785 = vmatpush1.msra.mxu0 0.0
  %786 = vmatprep.subr.mxu0 0.0
  %787 = vmatpush1.msra.mxu0 0.0
  %788 = vmatprep.subr.mxu0 0.0
  %789 = vmatpush1.msra.mxu0 0.0
  %790 = vmatprep.subr.mxu0 0.0
  %791 = vmatpush1.msra.mxu0 0.0
  %792 = vmatprep.mubr.f32.mxu0 0.0
  %793 = vmatmul.mubr.f32.gmra.mrb[0].mxu0 %v703
  %v794 = vpop.f32.mrb[0].mxu0
  %v795 = vadd.f32 %v726, %v794
  %v796 = vpop.f32.mrb[0].mxu0
  %797 = vmatprep.mubr.f32.mxu0 0.0
  %798 = vmatmul.mubr.f32.gmra.mrb[0].mxu0 %v704
  %v799 = vpop.f32.mrb[0].mxu0
  %v800 = vadd.f32 %v726, %v799
  %v801 = vpop.f32.mrb[0].mxu0
  %802 = vdwg.mxu0
  %vm803 = vcmask 56320
  %v804 = vsel %vm803, %v795, -inf
  %805 = vmax.xlane.f32.xlu0 %v804
  %v806 = vpop.xlane.xlu0 %805
  %v807 = vsel %vm803, %v800, -inf
  %808 = vmax.xlane.f32.xlu0 %v807
  %v809 = vpop.xlane.xlu0 %808
  %v810 = vsub.f32 %v795, %v806
  %v811 = vsub.f32 %v800, %v809
  %v812 = vmul.f32 %v810, 1.442695
  %v813 = vpow.pop %v812
  %v814 = vmul.f32 %v811, 1.442695
  %v815 = vpow.pop %v814
  %v816 = vsel %vm803, %v813, 0.0
  %817 = vadd.xlane.f32.xlu0 %v816
  %v818 = vpop.xlane.xlu0 %817
  %v819 = vsel %vm803, %v815, 0.0
  %820 = vadd.xlane.f32.xlu0 %v819
  %v821 = vpop.xlane.xlu0 %820
  %v822 = vlog2.pop %v818
  %v823 = vmul.f32 %v822, 0.6931472
  %v824 = vlog2.pop %v821
  %v825 = vmul.f32 %v824, 0.6931472
  %v826 = vsub.f32 %v810, %v823
  %v827 = vsub.f32 %v811, %v825
  %v828 = vsel %vm803, %v826, %v795
  %v829 = vsel %vm803, %v827, %v800
  %vm830 = vcmask 64512
  %v831 = vsel %vm830, %v828, 0.0
  %v832 = vsel %vm830, %v829, 0.0
  %833 = vst [vmem:[%s11] sm:$0xff] %v831
  %834 = vst [vmem:[%s11 + $0x8] sm:$0xff] %v832
  // Predicated region
  $region46: #{ac_model_forward.1} parent=0 // pred_check
    _
  $region47: #{ac_model_forward.1} parent=0 // pred_check_branch
    %836 = sbr.rel (0) target = $region49
  $region48: #{ac_model_forward.1} parent=0 // pred_region
    _
  $region49: #{ac_model_forward.1} parent=0 // pred_fallthru
    _
  // Predicated region
  $region50: #{ac_model_forward.1} parent=0 // pred_check
    _
  $region51: #{ac_model_forward.1} parent=0 // pred_check_branch
    %838 = sbr.rel (0) target = $region53
  $region52: #{ac_model_forward.1} parent=0 // pred_region
    _
  $region53: #{ac_model_forward.1} parent=0 // pred_fallthru
    _

</llo_original>
